<compile_context>
chip_gen: v6e
topology: v6e:2x2x1
jax: 0.10.0
libtpu: 0.0.40
codegen_flags: <defaults>
</compile_context>

<pallas_src>
import jax
import jax.numpy as jnp
from jax.experimental import pallas as pl
from jax.experimental.pallas import tpu as pltpu


def _scale_kernel(scale_ref, x_ref, o_ref):
    # scale_ref: (1,) f32 in SMEM (abs + lr_mult already folded in).
    # x_ref / o_ref: (TILE_R, COLS) VMEM tiles.
    o_ref[...] = (x_ref[...] * scale_ref[0]).astype(o_ref.dtype)


# ~2 MiB per block => (in + out) * 2 buffers = ~8 MiB VMEM, safely under the
# 16 MiB default scoped-VMEM on v5e and the 32 MiB default on v6e/v7x.
_TARGET_BLOCK_BYTES = 2 * 1024 * 1024

# Preferred lane widths (wide, unmasked full-width stores / big DMA descriptors).
_COL_CANDIDATES = (1024, 2048, 4096, 512, 256, 128)


def _pick_cols(total):
    for c in _COL_CANDIDATES:
        if total % c == 0:
            return c
    return None


def _pick_tile_rows(rows, cols, itemsize, pack):
    tile_r = max(pack, _TARGET_BLOCK_BYTES // (cols * itemsize))
    tile_r = (tile_r // pack) * pack
    if tile_r >= rows:
        return rows           # full-extent block (always legal)
    return tile_r


def scale_layer_forward(x, scale_param, lr_mult=1.0, donate_input=False):
    """x: any-shape float array (NCHW here). scale_param: (1,) float32."""
    orig_shape = x.shape
    orig_dtype = x.dtype
    total = x.size

    itemsize = jnp.dtype(orig_dtype).itemsize
    # Sublane packing: f32 -> 8, bf16 -> 16, int8/fp8 -> 32.
    pack = {4: 8, 2: 16, 1: 32}.get(itemsize, 8)

    # Fold lr_mult and abs() into the scalar on the host side (trivial glue).
    scale_eff = jnp.abs(scale_param.astype(jnp.float32) * jnp.float32(lr_mult))

    cols = _pick_cols(total)
    pad_elems = 0
    if cols is None:
        # Ragged size: pad flat array up to an (pack, 128)-aligned slab so the
        # kernel sees full-occupancy vregs and unmasked stores.
        align = pack * 128
        padded_total = ((total + align - 1) // align) * align
        pad_elems = padded_total - total
        flat = jnp.pad(x.reshape(-1), (0, pad_elems)).reshape(padded_total // 128, 128)
        cols = 128
    else:
        flat = x.reshape(total // cols, cols)

    rows = flat.shape[0]
    tile_r = _pick_tile_rows(rows, cols, itemsize, pack)
    grid = (pl.cdiv(rows, tile_r),)

    io_aliases = {1: 0} if donate_input else {}

    out = pl.pallas_call(
        _scale_kernel,
        out_shape=jax.ShapeDtypeStruct((rows, cols), orig_dtype),
        grid=grid,
        in_specs=[
            pl.BlockSpec(memory_space=pltpu.MemorySpace.SMEM),   # scale (1,) f32
            pl.BlockSpec((tile_r, cols), lambda i: (i, 0)),      # x row tile
        ],
        out_specs=pl.BlockSpec((tile_r, cols), lambda i: (i, 0)),
        compiler_params=pltpu.CompilerParams(
            # Row tiles are fully independent -> shard across both TCs on v7x.
            dimension_semantics=("parallel",),
        ),
        input_output_aliases=io_aliases,
    )(scale_eff, flat)

    if pad_elems:
        out = out.reshape(-1)[:total]
    return out.reshape(orig_shape)


if __name__ == "__main__":
    key = jax.random.PRNGKey(0)

    # Module parameter setup (deterministic, mirrors __init__):
    init_value = 1.0
    lr_mult = 1.0
    scale_param = jnp.full((1,), init_value / lr_mult, dtype=jnp.float32)

    # Example NCHW input (lane-dense path).
    x = jax.random.normal(key, (2, 4, 16, 16), dtype=jnp.float32)
    y = jax.block_until_ready(scale_layer_forward(x, scale_param, lr_mult=lr_mult))
    ref = x * jnp.abs(scale_param * lr_mult)
    assert y.shape == x.shape and y.dtype == x.dtype
    assert jnp.allclose(y, ref, atol=1e-6), "mismatch vs reference (aligned path)"

    # Ragged-size input (padding fallback path).
    x2 = jax.random.normal(jax.random.PRNGKey(1), (3, 5, 7), dtype=jnp.float32)
    y2 = jax.block_until_ready(scale_layer_forward(x2, scale_param, lr_mult=lr_mult))
    ref2 = x2 * jnp.abs(scale_param * lr_mult)
    assert y2.shape == x2.shape and y2.dtype == x2.dtype
    assert jnp.allclose(y2, ref2, atol=1e-6), "mismatch vs reference (padded path)"

    print("KERNEL_OK")
</pallas_src>

<mosaic_0001>
module attributes {stable_mosaic.version = 11 : i64} {
  func.func @_scale_kernel(%arg0: i32, %arg1: memref<1xf32, #tpu.memory_space<smem>>, %arg2: memref<2x1024xf32, #tpu.memory_space<vmem>>, %arg3: memref<2x1024xf32, #tpu.memory_space<vmem>>) attributes {dimension_semantics = [#tpu.dimension_semantics<parallel>], iteration_bounds = array<i64: 1>, scalar_prefetch = 0 : i64, scratch_operands = 0 : i64, tpu.core_type = #tpu.core_type<tc>, window_params = [{transform_indices = @transform_0, window_bounds = array<i64: 1>}, {transform_indices = @transform_1, window_bounds = array<i64: 2, 1024>}, {transform_indices = @transform_2, window_bounds = array<i64: 2, 1024>}]} {
    %c0 = arith.constant 0 : index
    %c0_0 = arith.constant 0 : index
    %0 = vector.load %arg2[%c0, %c0_0] : memref<2x1024xf32, #tpu.memory_space<vmem>>, vector<2x1024xf32>
    %c0_1 = arith.constant 0 : index
    %1 = memref.load %arg1[%c0_1] : memref<1xf32, #tpu.memory_space<smem>>
    %2 = vector.broadcast %1 : f32 to vector<2x1024xf32>
    %3 = arith.mulf %0, %2 : vector<2x1024xf32>
    %c0_2 = arith.constant 0 : index
    %c0_3 = arith.constant 0 : index
    %4 = vector.load %arg3[%c0_2, %c0_3] : memref<2x1024xf32, #tpu.memory_space<vmem>>, vector<2x1024xf32>
    tpu.vector_store %arg3[%c0_2, %c0_3], %3 {strides = array<i32>} : memref<2x1024xf32, #tpu.memory_space<vmem>>, vector<2x1024xf32>,
    return
  }
  func.func @transform_0(%arg0: i32) -> i32 {
    %c0_i32 = arith.constant 0 : i32
    %c0_i32_0 = arith.constant 0 : i32
    return %c0_i32 : i32
  }
  func.func @transform_1(%arg0: i32) -> (i32, i32) {
    %c0_i32 = arith.constant 0 : i32
    %c0_i32_0 = arith.constant 0 : i32
    return %arg0, %c0_i32 : i32, i32
  }
  func.func @transform_2(%arg0: i32) -> (i32, i32) {
    %c0_i32 = arith.constant 0 : i32
    %c0_i32_0 = arith.constant 0 : i32
    return %arg0, %c0_i32 : i32, i32
  }
}

</mosaic_0001>

<llo_original>
// kernel: tpu_custom_call.1
$region0: #{tpu_custom_call.1}
  #allocation0 [shape = 'u32[]', space=smem, size = 0x4, offset = 0x4, fixed_abs, tag = 'smem constant byte address 0x4 - core index']
  #allocation1 [shape = 'u32[144,128]{1,0:T(1,128)}', space=vmem, size = 0x12000, scoped, tag = 'internal scratch']
  #allocation2 [shape = 'f32[1]{0:T(128)S(6)}', space=smem, size = 0x200, scoped, tag = 'scoped memory for tpu_custom_call.1']
  %s0 = inlined_call_operand.<no memory space> [shape: f32[1], index: 0, kind: input, shape index: {}]
  %s1 = inlined_call_operand.hbm [shape: f32[2,1024], index: 1, kind: input, shape index: {}]
  %s2 = inlined_call_operand.hbm [shape: f32[2,1024], index: 2, kind: output, shape index: {}]
  %s3 = sld [smem:[#allocation0]]
  $region22: #{tpu_custom_call.1} parent=0
    _
  %s5 = ssub.s32 1, %s3
  %s6 = scalar_select 0, %s5, %s3
  %7 = sst [smem:[#allocation2]] %s0
  $region1: #{tpu_custom_call.1} parent=0
    #allocation3 [shape = 'u8[8192]{0}', space=vmem, size = 0x2000, scoped, tag = 'input window, operand 1, single buffered']
    #allocation4 [shape = 's32[1]{0}', space=sflag, size = 0x4, scoped, tag = 'scoped memory for tpu_custom_call.1']
    #allocation5 [shape = 's32[1]{0}', space=sflag, size = 0x4, scoped, tag = 'scoped memory for tpu_custom_call.1']
    #allocation6 [shape = 'u8[8192]{0}', space=vmem, size = 0x2000, scoped, tag = 'output window, operand 0, single buffered']
    %8 = vsyncpa [#allocation4], 0
    %9 = vsyncpa [#allocation5], 0
    // Predicated region
    $region2: #{tpu_custom_call.1} parent=1 // pred_check
      _
    $region3: #{tpu_custom_call.1} parent=1 // pred_check_branch
      %11 = sbr.rel (0) target = $region5
    $region4: #{tpu_custom_call.1} parent=1 // pred_region
      _
    $region5: #{tpu_custom_call.1} parent=1 // pred_fallthru
      _
    // Predicated region
    $region6: #{tpu_custom_call.1} parent=1 // pred_check
      _
    $region7: #{tpu_custom_call.1} parent=1 // pred_check_branch
      %13 = sbr.rel (0) target = $region9
    $region8: #{tpu_custom_call.1} parent=1 // pred_region
      %s15 = ssub.s32 256, 256
      %16 = vsyncadd [#allocation4], %s15
      %s18 = sshll.u32 [#allocation3], 4
      %s19 = int_to_ptr.vmem [resolvable:$true] %s18
      %21 = dma.hbm_to_vmem [thread:$0]  %s1, 256, %s19, [#allocation4]
    $region9: #{tpu_custom_call.1} parent=1 // pred_fallthru
      _
    // Predicated region
    $region10: #{tpu_custom_call.1} parent=1 // pred_check
      _
    $region11: #{tpu_custom_call.1} parent=1 // pred_check_branch
      %23 = sbr.rel (0) target = $region13
    $region12: #{tpu_custom_call.1} parent=1 // pred_region
      %24 = dma.done [#allocation4], 256
    $region13: #{tpu_custom_call.1} parent=1 // pred_fallthru
      _
    %v25 = vld [vmem:[#allocation3] sm:$0xff]
    %v26 = vld [vmem:[#allocation3 + $0x8] sm:$0xff]
    %s27 = sld [smem:[#allocation2]]
    %v28 = vstv %s27
    %v29 = vmul.f32 %v25, %v28
    %v30 = vmul.f32 %v26, %v28
    %31 = vst [vmem:[#allocation6] sm:$0xff] %v29
    %32 = vst [vmem:[#allocation6 + $0x8] sm:$0xff] %v30
    // Predicated region
    $region14: #{tpu_custom_call.1} parent=1 // pred_check
      _
    $region15: #{tpu_custom_call.1} parent=1 // pred_check_branch
      %34 = sbr.rel (0) target = $region17
    $region16: #{tpu_custom_call.1} parent=1 // pred_region
      %s36 = ssub.s32 256, 256
      %37 = vsyncadd [#allocation5], %s36
      %s39 = sshll.u32 [#allocation6], 4
      %s40 = int_to_ptr.vmem [resolvable:$true] %s39
      %42 = dma.vmem_to_hbm [thread:$0]  %s40, 256, %s2, [#allocation5]
    $region17: #{tpu_custom_call.1} parent=1 // pred_fallthru
      _
    // Predicated region
    $region18: #{tpu_custom_call.1} parent=1 // pred_check
      _
    $region19: #{tpu_custom_call.1} parent=1 // pred_check_branch
      %44 = sbr.rel (0) target = $region21
    $region20: #{tpu_custom_call.1} parent=1 // pred_region
      %45 = dma.done [#allocation5], 256
    $region21: #{tpu_custom_call.1} parent=1 // pred_fallthru
      _
    %46 = vsyncpa [#allocation4], 1
    %47 = vsyncpa [#allocation5], 1

</llo_original>
